<compile_context>
chip_gen: v7x
topology: tpu7x:2x2x1
jax: 0.10.0
libtpu: 0.0.40
codegen_flags: <defaults>
</compile_context>

<pallas_src>
import jax
import jax.numpy as jnp
from jax.experimental import pallas as pl
from jax.experimental.pallas import tpu as pltpu

_LANES = 128
_ACC_SUBLANES = 32          # 4 independent (8,128) vreg accumulator chains
_ROW_ALIGN = 32             # row padding multiple (must divide every fold)
_SUB_ROWS = 512             # rows folded per inner step (256 KiB f32 max)
_MAX_BLOCK_ROWS = 8192      # 8192 x 128 f32 = 4 MiB per input buffer
_FAST_PATH_MAX_ELEMS = 64 * 1024  # single full-array block below this size


def _small_loss_kernel(x_ref, o_ref):
    """Whole (small) array in one VMEM block: |1 - sum(x)| -> SMEM scalar."""
    total = jnp.sum(x_ref[...].astype(jnp.float32))
    o_ref[0, 0] = jnp.abs(jnp.float32(1.0) - total)


def _partial_sums_kernel(x_ref, o_ref):
    """Streams (block_rows, 128) blocks; accumulates a (32,128) partial sum
    per 'parallel' chunk directly in the resident output block."""
    b = pl.program_id(1)

    @pl.when(b == 0)
    def _():
        o_ref[...] = jnp.zeros_like(o_ref)

    block_rows = x_ref.shape[0]                      # static at trace time
    n_full, tail = divmod(block_rows, _SUB_ROWS)     # tail is a multiple of 32

    def fold(row0, nrows):
        # Bounded sub-chunk: native-dtype load -> f32 upcast -> VPU adds into
        # 4 independent (8,128) accumulator vregs. No cross-lane work here.
        sub = x_ref[pl.ds(row0, nrows), :].astype(jnp.float32)
        return sub.reshape(-1, _ACC_SUBLANES, _LANES).sum(axis=0)

    acc = jnp.zeros((_ACC_SUBLANES, _LANES), jnp.float32)
    for j in range(n_full):                          # static offsets, unrolled
        acc += fold(j * _SUB_ROWS, _SUB_ROWS)
    if tail:
        acc += fold(n_full * _SUB_ROWS, tail)

    o_ref[...] += acc


def sum_of_weights_loss(kernel):
    """|1 - sum(kernel)| == L1Loss(ones(1), sum(kernel).unsqueeze(0))."""
    n = int(kernel.size)
    itemsize = jnp.dtype(kernel.dtype).itemsize

    # ---- Fast path: tiny kernels (the real 13x13 KernelGAN case). ----------
    if n <= _FAST_PATH_MAX_ELEMS:
        x2d = kernel if kernel.ndim == 2 else kernel.reshape(1, n)
        out = pl.pallas_call(
            _small_loss_kernel,
            out_shape=jax.ShapeDtypeStruct((1, 1), jnp.float32),
            in_specs=[pl.BlockSpec(memory_space=pltpu.MemorySpace.VMEM)],
            out_specs=pl.BlockSpec(memory_space=pltpu.MemorySpace.SMEM),
            cost_estimate=pl.CostEstimate(
                flops=n, transcendentals=0,
                bytes_accessed=n * itemsize + 4),
        )(x2d)
        return out[0, 0]

    # ---- Streaming path: big blocks + 2-way "parallel" chunk split. --------
    flat = kernel.reshape(-1)                        # native dtype
    rows = pl.cdiv(n, _LANES)
    num_blocks = pl.cdiv(rows, _MAX_BLOCK_ROWS)
    num_chunks = 2 if num_blocks >= 2 else 1         # v7x: one chunk per TC
    num_blocks = pl.cdiv(num_blocks, num_chunks) * num_chunks
    block_rows = pl.cdiv(pl.cdiv(rows, num_blocks), _ROW_ALIGN) * _ROW_ALIGN
    padded_rows = num_blocks * block_rows            # pad waste < ~1%
    pad = padded_rows * _LANES - n
    if pad:
        flat = jnp.pad(flat, (0, pad))               # zeros don't change sum
    x2d = flat.reshape(padded_rows, _LANES)

    blocks_per_chunk = num_blocks // num_chunks
    grid = (num_chunks, blocks_per_chunk)

    partials = pl.pallas_call(
        _partial_sums_kernel,
        out_shape=jax.ShapeDtypeStruct(
            (num_chunks * _ACC_SUBLANES, _LANES), jnp.float32),
        grid_spec=pltpu.PrefetchScalarGridSpec(
            num_scalar_prefetch=0,
            grid=grid,
            in_specs=[pl.BlockSpec(
                (block_rows, _LANES),
                lambda c, b: (c * blocks_per_chunk + b, 0))],
            out_specs=pl.BlockSpec(
                (_ACC_SUBLANES, _LANES), lambda c, b: (c, 0)),
        ),
        compiler_params=pltpu.CompilerParams(
            # chunk axis splits across TensorCores; block axis carries the
            # resident accumulator -> sequential.
            dimension_semantics=("parallel", "arbitrary")),
        cost_estimate=pl.CostEstimate(
            flops=int(padded_rows) * _LANES,
            transcendentals=0,
            bytes_accessed=int(padded_rows) * _LANES * itemsize
            + num_chunks * _ACC_SUBLANES * _LANES * 4),
    )(x2d)

    # Tiny cross-chunk combine (<= 2 x 32 x 128 f32) + |1 - total| in the
    # wrapper, per the 2-TC partial-sum design.
    return jnp.abs(jnp.float32(1.0) - jnp.sum(partials))


if __name__ == "__main__":
    key = jax.random.PRNGKey(0)
    k1, k2, k3, k4 = jax.random.split(key, 4)

    # 1) The real use case: small imitated conv kernel (13x13) -> fast path.
    k_small = jax.random.normal(k1, (13, 13), dtype=jnp.float32) * 0.05
    got = jax.block_until_ready(sum_of_weights_loss(k_small))
    ref = jnp.abs(1.0 - jnp.sum(k_small))
    assert jnp.allclose(got, ref, rtol=1e-5, atol=1e-5), (got, ref)

    # 2) bf16 fast path (guards native-dtype streaming + in-kernel upcast).
    k_bf = (jax.random.normal(k2, (13, 13), dtype=jnp.float32) * 0.05
            ).astype(jnp.bfloat16)
    got = jax.block_until_ready(sum_of_weights_loss(k_bf))
    ref = jnp.abs(1.0 - jnp.sum(k_bf.astype(jnp.float32)))
    assert jnp.allclose(got, ref, rtol=1e-4, atol=1e-4), (got, ref)

    # 3) Large f32 input: single-block streaming path (8192 x 128 block).
    k_large = jax.random.normal(k3, (1024, 1024), dtype=jnp.float32) * 0.05
    got = jax.block_until_ready(sum_of_weights_loss(k_large))
    ref = jnp.abs(1.0 - jnp.sum(k_large))
    assert jnp.allclose(got, ref, rtol=1e-4, atol=1e-3), (got, ref)

    # 4) Larger bf16 input: multi-block, 2-chunk "parallel" partial-sum path.
    k_huge = (jax.random.normal(k4, (2048, 1200), dtype=jnp.float32) * 0.01
              ).astype(jnp.bfloat16)
    got = jax.block_until_ready(sum_of_weights_loss(k_huge))
    ref = jnp.abs(1.0 - jnp.sum(k_huge.astype(jnp.float32)))
    assert jnp.allclose(got, ref, rtol=1e-3, atol=1e-2), (got, ref)

    print("KERNEL_OK")
</pallas_src>

<mosaic_0001>
module attributes {stable_mosaic.version = 11 : i64} {
  func.func @_small_loss_kernel(%arg0: memref<13x13xf32, #tpu.memory_space<vmem>>, %arg1: memref<1x1xf32, #tpu.memory_space<smem>>) attributes {dimension_semantics = [], scalar_prefetch = 0 : i64, scratch_operands = 0 : i64, tpu.core_type = #tpu.core_type<tc>} {
    %c0 = arith.constant 0 : index
    %c0_0 = arith.constant 0 : index
    %0 = vector.load %arg0[%c0, %c0_0] : memref<13x13xf32, #tpu.memory_space<vmem>>, vector<13x13xf32>
    %1 = vector.shape_cast %0 : vector<13x13xf32> to vector<1x13x13xf32>
    %cst = arith.constant dense<0.000000e+00> : vector<1xf32>
    %2 = vector.multi_reduction <add>, %1, %cst [1, 2] : vector<1x13x13xf32> to vector<1xf32>
    %3 = vector.shape_cast %2 : vector<1xf32> to vector<1x1x1xf32>
    %4 = vector.extract %3[0, 0, 0] : f32 from vector<1x1x1xf32>
    %cst_1 = arith.constant 1.000000e+00 : f32
    %5 = arith.subf %cst_1, %4 : f32
    %6 = math.absf %5 : f32
    %c0_2 = arith.constant 0 : index
    %c0_3 = arith.constant 0 : index
    %7 = memref.load %arg1[%c0_2, %c0_3] : memref<1x1xf32, #tpu.memory_space<smem>>
    memref.store %6, %arg1[%c0_2, %c0_3] : memref<1x1xf32, #tpu.memory_space<smem>>
    return
  }
}

</mosaic_0001>

<llo_original>
// kernel: tpu_custom_call.1
$region0: #{tpu_custom_call.1}
  #allocation0 [shape = 'u32[]', space=smem, size = 0x4, offset = 0x4, fixed_abs, tag = 'smem constant byte address 0x4 - core index']
  #allocation1 [shape = 'u32[144,128]{1,0:T(1,128)}', space=vmem, size = 0x12000, scoped, tag = 'internal scratch']
  %s0 = inlined_call_operand.hbm [shape: f32[13,13], index: 0, kind: input, shape index: {}]
  %s1 = inlined_call_operand.hbm [shape: f32[1,1], index: 1, kind: output, shape index: {}]
  %s2 = sld [smem:[#allocation0]]
  $region18: #{tpu_custom_call.1} parent=0
    _
  %s4 = ssub.s32 1, %s2
  %s5 = scalar_select 0, %s4, %s2
  $region1: #{tpu_custom_call.1} parent=0
    #allocation2 [shape = 'u8[8192]{0}', space=vmem, size = 0x2000, scoped, tag = 'input window, operand 0, single buffered']
    #allocation3 [shape = 's32[1]{0}', space=sflag, size = 0x4, scoped, tag = 'scoped memory for tpu_custom_call.1']
    #allocation4 [shape = 's32[1]{0}', space=sflag, size = 0x4, scoped, tag = 'scoped memory for tpu_custom_call.1']
    #allocation5 [shape = 'u8[512]{0}', space=smem, size = 0x200, scoped, tag = 'output window, operand 0, single buffered']
    %6 = vsyncpa [#allocation3], 0
    %7 = vsyncpa [#allocation4], 0
    // Predicated region
    $region2: #{tpu_custom_call.1} parent=1 // pred_check
      _
    $region3: #{tpu_custom_call.1} parent=1 // pred_check_branch
      %9 = sbr.rel (0) target = $region5
    $region4: #{tpu_custom_call.1} parent=1 // pred_region
      %s11 = ssub.s32 256, 256
      %12 = vsyncadd [#allocation3], %s11
      %s13 = sshll.u32 [#allocation2], 4
      %s14 = int_to_ptr.vmem [resolvable:$true] %s13
      %19 = dma.hbm_to_vmem [thread:$0]  %s0, 256, %s14, [#allocation3], 128, 128, 8
    $region5: #{tpu_custom_call.1} parent=1 // pred_fallthru
      _
    // Predicated region
    $region6: #{tpu_custom_call.1} parent=1 // pred_check
      _
    $region7: #{tpu_custom_call.1} parent=1 // pred_check_branch
      %21 = sbr.rel (0) target = $region9
    $region8: #{tpu_custom_call.1} parent=1 // pred_region
      %22 = dma.done [#allocation3], 256
    $region9: #{tpu_custom_call.1} parent=1 // pred_fallthru
      _
    %v23 = vld [vmem:[#allocation2] sm:$0xff]
    %v24 = vld [vmem:[#allocation2 + $0x8] sm:$0x1f]
    %vm25 = vcmask 105472
    %v26 = vsel %vm25, %v23, 0.0
    %vm27 = vcmask 102400
    %v28 = vsel %vm27, %v24, 0.0
    %v29 = vadd.f32 %v26, %v28
    %30 = vadd.xlane.f32.xlu0 %v29
    %v31 = vpop.xlane.xlu0 %30
    %v32 = vrot.slane %v31, 4
    %v33 = vadd.f32 %v31, %v32
    %v34 = vrot.slane %v33, 2
    %v35 = vadd.f32 %v33, %v34
    %v36 = vrot.slane %v35, 1
    %v37 = vadd.f32 %v35, %v36
    %s38 = vtos %v37
    %s39 = ssub.f32 1.0, %s38
    %s40 = sand.u32 2147483647, %s39
    %s41 = scalar_lea.smem [#allocation5], 0
    %42 = sst [smem:[%s41]] %s40
    // Predicated region
    $region10: #{tpu_custom_call.1} parent=1 // pred_check
      _
    $region11: #{tpu_custom_call.1} parent=1 // pred_check_branch
      %44 = sbr.rel (0) target = $region13
    $region12: #{tpu_custom_call.1} parent=1 // pred_region
      %s46 = ssub.s32 16, 16
      %47 = vsyncadd [#allocation4], %s46
      %50 = dma.smem_to_hbm [#allocation5], 16, %s1, [#allocation4]
    $region13: #{tpu_custom_call.1} parent=1 // pred_fallthru
      _
    // Predicated region
    $region14: #{tpu_custom_call.1} parent=1 // pred_check
      _
    $region15: #{tpu_custom_call.1} parent=1 // pred_check_branch
      %52 = sbr.rel (0) target = $region17
    $region16: #{tpu_custom_call.1} parent=1 // pred_region
      %53 = dma.done [#allocation4], 16
    $region17: #{tpu_custom_call.1} parent=1 // pred_fallthru
      _
    %54 = sfence
    %55 = vsyncpa [#allocation3], 1
    %56 = vsyncpa [#allocation4], 1

</llo_original>
